<compile_context>
chip_gen: v6e
topology: v6e:2x2x1
jax: 0.10.0
libtpu: 0.0.40
codegen_flags: <defaults>
</compile_context>

<pallas_src>
import functools

import jax
import jax.numpy as jnp
from jax import lax
from jax.experimental import pallas as pl
from jax.experimental.pallas import tpu as pltpu

NEG_SLOPE = 0.01   # nn.LeakyReLU default negative_slope
LN_EPS = 1e-5      # nn.LayerNorm default eps
LANE = 128


# ----------------------------------------------------------------------------
# Kernels
# ----------------------------------------------------------------------------

def _embed_4d_kernel(x_ref, w_ref, b_ref, o_ref, acc_ref, *, inv_hw,
                     n_lane_chunks):
    """x block: [tb, C, ts] (flattened spatial, ts % 128 == 0).

    Steady state: VPU-add 128-lane-aligned chunks into a lane-dense
    [tb, C, 128] accumulator (no XLU work in the hot loop).  Finalize: one
    cross-lane reduce, matmul, bias, LeakyReLU.
    """
    j = pl.program_id(1)

    @pl.when(j == 0)
    def _():
        acc_ref[...] = jnp.zeros_like(acc_ref)

    x = x_ref[...].astype(jnp.float32)                       # [tb, C, ts]
    partial = x[:, :, 0:LANE]
    for k in range(1, n_lane_chunks):                        # static unroll; pure VPU
        partial = partial + x[:, :, k * LANE:(k + 1) * LANE]
    acc_ref[...] += partial                                  # [tb, C, 128]

    @pl.when(j == pl.num_programs(1) - 1)
    def _():
        pooled = jnp.sum(acc_ref[...], axis=-1) * inv_hw     # single XLU reduce
        y = jnp.dot(pooled, w_ref[...],
                    preferred_element_type=jnp.float32) + b_ref[...]
        o_ref[...] = jnp.where(y >= 0.0, y, NEG_SLOPE * y)


def _embed_3d_kernel(x_ref, g_ref, beta_ref, w_ref, b_ref, o_ref, acc_ref, *,
                     inv_l, inv_c):
    """x block: [tb, tl, C].

    One-pass LN stats (sum, sum-of-squares) + single fused x*a + b normalize
    (affine deferred), accumulate the L-sum; finalize applies the deferred
    affine on the pooled [tb, C], the second LN, linear and LeakyReLU.
    """
    j = pl.program_id(1)

    @pl.when(j == 0)
    def _():
        acc_ref[...] = jnp.zeros_like(acc_ref)

    x = x_ref[...].astype(jnp.float32)                       # [tb, tl, C]
    s1 = jnp.sum(x, axis=-1, keepdims=True)                  # [tb, tl, 1]
    s2 = jnp.sum(x * x, axis=-1, keepdims=True)
    mu = s1 * inv_c
    var = jnp.maximum(s2 * inv_c - mu * mu, 0.0)             # guard tiny negatives
    a = lax.rsqrt(var + LN_EPS)
    b = -mu * a
    xn = x * a + b                                           # normalized, affine deferred
    acc_ref[...] += jnp.sum(xn, axis=1)                      # [tb, C]

    @pl.when(j == pl.num_programs(1) - 1)
    def _():
        g = g_ref[...]                                       # [1, C]
        bt = beta_ref[...]                                   # [1, C]
        p = acc_ref[...] * inv_l * g + bt                    # pooled + deferred affine
        mu2 = jnp.mean(p, axis=-1, keepdims=True)            # small [tb, C]: two-pass ok
        var2 = jnp.mean(jnp.square(p - mu2), axis=-1, keepdims=True)
        pn = (p - mu2) * lax.rsqrt(var2 + LN_EPS) * g + bt
        y = jnp.dot(pn, w_ref[...],
                    preferred_element_type=jnp.float32) + b_ref[...]
        o_ref[...] = jnp.where(y >= 0.0, y, NEG_SLOPE * y)


# ----------------------------------------------------------------------------
# Parameter init / preparation
# ----------------------------------------------------------------------------

def init_params(key, in_channels, width):
    """Deterministic synthetic init (PyTorch-style shapes)."""
    k1, k2, k3, k4 = jax.random.split(key, 4)
    bound = 1.0 / jnp.sqrt(float(in_channels))
    return {
        # nn.LayerNorm(in_channels): weight/bias of shape [C]
        "gamma": 1.0 + 0.1 * jax.random.normal(k1, (in_channels,), jnp.float32),
        "beta": 0.1 * jax.random.normal(k2, (in_channels,), jnp.float32),
        # nn.Linear(in_channels, width): weight [width, C], bias [width]
        "weight": jax.random.uniform(k3, (width, in_channels), jnp.float32,
                                     -bound, bound),
        "bias": jax.random.uniform(k4, (width,), jnp.float32, -bound, bound),
    }


def _round_up(n, m):
    return ((n + m - 1) // m) * m


def prepare_params(params, lane=LANE):
    """One-time layout prep: transpose the Linear weight and pad the output
    width to a lane-dense multiple of 128 (padded columns are zero, so the
    padded outputs are exactly 0 and get sliced off in the wrapper)."""
    w = params["weight"].astype(jnp.float32)              # [width, C]
    width, c = w.shape
    wp = _round_up(width, lane)
    w_t = jnp.zeros((c, wp), jnp.float32).at[:, :width].set(w.T)
    b2 = jnp.zeros((1, wp), jnp.float32).at[:, :width].set(
        params["bias"].astype(jnp.float32))
    return {
        "w_t": w_t,                                        # [C, width_pad]
        "b2": b2,                                          # [1, width_pad]
        "g2": params["gamma"].astype(jnp.float32).reshape(1, -1),
        "bt2": params["beta"].astype(jnp.float32).reshape(1, -1),
        "width": width,
    }


# ----------------------------------------------------------------------------
# Per-generation VMEM budget + joint tile selection
# ----------------------------------------------------------------------------

def _vmem_config():
    """(scoped vmem limit, tile byte budget ~50% of limit, x buffer depth)."""
    try:
        phys = int(pltpu.get_tpu_info().vmem_capacity_bytes)
    except Exception:
        phys = 64 * 1024 * 1024            # conservative (v7x-sized) fallback
    if phys >= 100 * 1024 * 1024:          # v5e / v6e: 128 MiB physical VMEM
        limit = 96 * 1024 * 1024
        x_buffers = 3                      # plenty of VMEM: deeper x buffering
    else:                                  # v7x: 64 MiB per TensorCore
        limit = min(48 * 1024 * 1024, max(32 * 1024 * 1024, phys * 3 // 4))
        x_buffers = 2
    return limit, limit // 2, x_buffers


def _batch_tile_candidates(B):
    """Divisors of B giving (multiple-of-8 or full-B) output blocks; capped at
    B//2 when B >= 16 so the 'parallel' axis keeps >= 2 blocks (both v7x TCs)."""
    cap = B if B < 16 else B // 2
    cands = [t for t in range(min(cap, 512), 0, -1)
             if B % t == 0 and (t % 8 == 0 or t == B)]
    return cands or [B]


def _reduce_tile_candidates(R, align, cap):
    r_full = _round_up(R, align)
    cands = set()
    v = align
    while v <= min(cap, r_full):
        cands.add(v)
        v *= 2
    if r_full <= cap:
        cands.add(r_full)
    return sorted(cands, reverse=True)


def _choose_tiles(B, C, R, wp, *, r_align, r_cap, acc_lanes, budget_bytes,
                  x_buffers):
    """Jointly pick (tb, tr): streamed-x buffers + accumulator + resident
    params + output buffers must all fit the per-generation VMEM budget.
    (Bytes are estimated at 4 B/elem — conservative for bf16 inputs.)"""
    tb_cands = _batch_tile_candidates(B)
    tr_cands = _reduce_tile_candidates(R, r_align, r_cap)
    resident = C * wp * 4 + (2 * C + wp) * 4          # weight + gamma/beta/bias
    best = None
    for tb in tb_cands:
        for tr in tr_cands:
            total = (x_buffers * tb * C * tr * 4      # streamed x blocks
                     + tb * C * acc_lanes * 4         # accumulator scratch
                     + resident
                     + 2 * tb * wp * 4)               # output double buffer
            if total <= budget_bytes:
                key = (tb * tr, tb)
                if best is None or key > best[0]:
                    best = (key, tb, tr)
    if best is None:                                  # nothing fits: smallest tiles
        return tb_cands[-1], tr_cands[-1]
    return best[1], best[2]


# ----------------------------------------------------------------------------
# Forward wrapper
# ----------------------------------------------------------------------------

def embedding_network_forward(x, params, prepared=None):
    if prepared is None:
        prepared = prepare_params(params)
    w_t, b2 = prepared["w_t"], prepared["b2"]
    width = prepared["width"]
    wp = w_t.shape[1]
    B = x.shape[0]

    limit, budget, x_buffers = _vmem_config()
    cp = pltpu.CompilerParams(
        dimension_semantics=("parallel", "arbitrary"),  # batch ||, reduce seq.
        vmem_limit_bytes=limit,
    )
    resident_mode = pl.Buffered(1)        # constant-index operands: fetch once

    if x.ndim >= 4:
        # use_norm == False branch: global spatial mean pool -> linear -> lrelu
        C = x.shape[1]
        hw = 1
        for d in x.shape[2:]:
            hw *= d
        x3 = x.reshape(B, C, hw)                       # lane-dense spatial axis
        tb, ts = _choose_tiles(B, C, hw, wp, r_align=LANE, r_cap=4096,
                               acc_lanes=LANE, budget_bytes=budget,
                               x_buffers=x_buffers)
        hw_pad = _round_up(hw, ts)
        if hw_pad != hw:                               # zeros add 0 to the sum
            x3 = jnp.pad(x3, ((0, 0), (0, 0), (0, hw_pad - hw)))
        grid = (B // tb, hw_pad // ts)
        kernel = functools.partial(_embed_4d_kernel, inv_hw=1.0 / float(hw),
                                   n_lane_chunks=ts // LANE)
        out = pl.pallas_call(
            kernel,
            out_shape=jax.ShapeDtypeStruct((B, wp), jnp.float32),
            grid_spec=pltpu.PrefetchScalarGridSpec(
                num_scalar_prefetch=0,
                grid=grid,
                in_specs=[
                    pl.BlockSpec((tb, C, ts), lambda i, j: (i, 0, j),
                                 pipeline_mode=pl.Buffered(x_buffers)),
                    pl.BlockSpec((C, wp), lambda i, j: (0, 0),
                                 pipeline_mode=resident_mode),
                    pl.BlockSpec((1, wp), lambda i, j: (0, 0),
                                 pipeline_mode=resident_mode),
                ],
                out_specs=pl.BlockSpec((tb, wp), lambda i, j: (i, 0)),
                scratch_shapes=[pltpu.VMEM((tb, C, LANE), jnp.float32)],
            ),
            compiler_params=cp,
        )(x3, w_t, b2)
    else:
        # use_norm == True branch: LN -> mean over L -> LN -> linear -> lrelu
        # TODO(synk): only the [B, L, C] (3-D) layout is implemented; a 2-D
        # input of the use_norm branch would need a separate pool-free path,
        # and C < 128 in production would warrant a lane-packing layout rework.
        _, L, C = x.shape
        r_align = 16 if x.dtype == jnp.bfloat16 else 8
        tb, tl = _choose_tiles(B, C, L, wp, r_align=r_align, r_cap=2048,
                               acc_lanes=1, budget_bytes=budget,
                               x_buffers=x_buffers)
        L_pad = _round_up(L, tl)
        if L_pad != L:                # zero rows normalize to 0 (affine deferred)
            x = jnp.pad(x, ((0, 0), (0, L_pad - L), (0, 0)))
        grid = (B // tb, L_pad // tl)
        kernel = functools.partial(_embed_3d_kernel, inv_l=1.0 / float(L),
                                   inv_c=1.0 / float(C))
        out = pl.pallas_call(
            kernel,
            out_shape=jax.ShapeDtypeStruct((B, wp), jnp.float32),
            grid_spec=pltpu.PrefetchScalarGridSpec(
                num_scalar_prefetch=0,
                grid=grid,
                in_specs=[
                    pl.BlockSpec((tb, tl, C), lambda i, j: (i, j, 0),
                                 pipeline_mode=pl.Buffered(x_buffers)),
                    pl.BlockSpec((1, C), lambda i, j: (0, 0),
                                 pipeline_mode=resident_mode),
                    pl.BlockSpec((1, C), lambda i, j: (0, 0),
                                 pipeline_mode=resident_mode),
                    pl.BlockSpec((C, wp), lambda i, j: (0, 0),
                                 pipeline_mode=resident_mode),
                    pl.BlockSpec((1, wp), lambda i, j: (0, 0),
                                 pipeline_mode=resident_mode),
                ],
                out_specs=pl.BlockSpec((tb, wp), lambda i, j: (i, 0)),
                scratch_shapes=[pltpu.VMEM((tb, C), jnp.float32)],
            ),
            compiler_params=cp,
        )(x, prepared["g2"], prepared["bt2"], w_t, b2)

    return out[:, :width] if wp != width else out


# ----------------------------------------------------------------------------
# Pure-JAX reference mirroring the PyTorch forward
# ----------------------------------------------------------------------------

def reference_forward(x, params):
    gamma, beta = params["gamma"], params["beta"]
    w, b = params["weight"], params["bias"]

    def ln(t):
        mu = t.mean(axis=-1, keepdims=True)
        var = ((t - mu) ** 2).mean(axis=-1, keepdims=True)
        return (t - mu) / jnp.sqrt(var + LN_EPS) * gamma + beta

    use_norm = x.ndim < 4
    if use_norm:
        x = ln(x)
        x = x.mean(axis=1)            # pool: mean over sequence
        x = ln(x)
    else:
        x = x.mean(axis=(2, 3))       # pool: global spatial average
    y = x @ w.T + b
    return jnp.where(y >= 0.0, y, NEG_SLOPE * y)


if __name__ == "__main__":
    key = jax.random.PRNGKey(0)
    k_x4, k_x3, k_p = jax.random.split(key, 3)

    B, C, H, W, L, WIDTH = 2, 4, 16, 16, 8, 32
    params = init_params(k_p, C, WIDTH)
    prepared = prepare_params(params)   # one-time weight transpose/pad

    # 4-D (conv feature map, NCHW) path
    x4 = jax.random.normal(k_x4, (B, C, H, W), jnp.float32)
    out4 = jax.block_until_ready(embedding_network_forward(x4, params, prepared))
    ref4 = reference_forward(x4, params)
    assert out4.shape == (B, WIDTH)
    assert jnp.allclose(out4, ref4, rtol=1e-4, atol=1e-4), \
        float(jnp.max(jnp.abs(out4 - ref4)))

    # 3-D ([B, L, C]) path exercising the LayerNorm branch
    x3 = jax.random.normal(k_x3, (B, L, C), jnp.float32)
    out3 = jax.block_until_ready(embedding_network_forward(x3, params, prepared))
    ref3 = reference_forward(x3, params)
    assert out3.shape == (B, WIDTH)
    assert jnp.allclose(out3, ref3, rtol=1e-4, atol=1e-4), \
        float(jnp.max(jnp.abs(out3 - ref3)))

    print("KERNEL_OK")
</pallas_src>

<mosaic_0001>
module attributes {stable_mosaic.version = 11 : i64} {
  func.func @_embed_4d_kernel(%arg0: i32, %arg1: i32, %arg2: memref<2x4x256xf32, #tpu.memory_space<vmem>>, %arg3: memref<4x128xf32, #tpu.memory_space<vmem>>, %arg4: memref<1x128xf32, #tpu.memory_space<vmem>>, %arg5: memref<2x128xf32, #tpu.memory_space<vmem>>, %arg6: memref<2x4x128xf32, #tpu.memory_space<vmem>>) attributes {dimension_semantics = [#tpu.dimension_semantics<parallel>, #tpu.dimension_semantics<arbitrary>], iteration_bounds = array<i64: 1, 1>, scalar_prefetch = 0 : i64, scratch_operands = 1 : i64, tpu.core_type = #tpu.core_type<tc>, window_params = [{pipeline_mode = #tpu.pipeline_mode<double_buffered>, transform_indices = @transform_0, window_bounds = array<i64: 2, 4, 256>}, {pipeline_mode = #tpu.pipeline_mode<synchronous>, transform_indices = @transform_1, window_bounds = array<i64: 4, 128>}, {pipeline_mode = #tpu.pipeline_mode<synchronous>, transform_indices = @transform_2, window_bounds = array<i64: 1, 128>}, {transform_indices = @transform_3, window_bounds = array<i64: 2, 128>}]} {
    %c0_i32 = arith.constant 0 : i32
    %0 = arith.cmpi eq, %arg1, %c0_i32 : i32
    %1 = arith.extui %0 : i1 to i32
    %c0_i32_0 = arith.constant 0 : i32
    %2 = arith.cmpi ne, %1, %c0_i32_0 : i32
    scf.if %2 {
      %cst = arith.constant 0.000000e+00 : f32
      %13 = vector.broadcast %cst : f32 to vector<2x4x128xf32>
      %c0_11 = arith.constant 0 : index
      %c0_12 = arith.constant 0 : index
      %c0_13 = arith.constant 0 : index
      %14 = vector.load %arg6[%c0_11, %c0_12, %c0_13] : memref<2x4x128xf32, #tpu.memory_space<vmem>>, vector<2x4x128xf32>
      tpu.vector_store %arg6[%c0_11, %c0_12, %c0_13], %13 {strides = array<i32>} : memref<2x4x128xf32, #tpu.memory_space<vmem>>, vector<2x4x128xf32>,
    } else {
    }
    %c0 = arith.constant 0 : index
    %c0_1 = arith.constant 0 : index
    %c0_2 = arith.constant 0 : index
    %3 = vector.load %arg2[%c0, %c0_1, %c0_2] : memref<2x4x256xf32, #tpu.memory_space<vmem>>, vector<2x4x256xf32>
    %4 = vector.extract_strided_slice %3 {offsets = [0, 0, 0], sizes = [2, 4, 128], strides = [1, 1, 1]} : vector<2x4x256xf32> to vector<2x4x128xf32>
    %5 = vector.extract_strided_slice %3 {offsets = [0, 0, 128], sizes = [2, 4, 128], strides = [1, 1, 1]} : vector<2x4x256xf32> to vector<2x4x128xf32>
    %6 = arith.addf %4, %5 : vector<2x4x128xf32>
    %c0_3 = arith.constant 0 : index
    %c0_4 = arith.constant 0 : index
    %c0_5 = arith.constant 0 : index
    %7 = vector.load %arg6[%c0_3, %c0_4, %c0_5] : memref<2x4x128xf32, #tpu.memory_space<vmem>>, vector<2x4x128xf32>
    %8 = arith.addf %7, %6 : vector<2x4x128xf32>
    %c0_6 = arith.constant 0 : index
    %c0_7 = arith.constant 0 : index
    %c0_8 = arith.constant 0 : index
    %9 = vector.load %arg6[%c0_6, %c0_7, %c0_8] : memref<2x4x128xf32, #tpu.memory_space<vmem>>, vector<2x4x128xf32>
    tpu.vector_store %arg6[%c0_6, %c0_7, %c0_8], %8 {strides = array<i32>} : memref<2x4x128xf32, #tpu.memory_space<vmem>>, vector<2x4x128xf32>,
    %c0_i32_9 = arith.constant 0 : i32
    %10 = arith.cmpi eq, %arg1, %c0_i32_9 : i32
    %11 = arith.extui %10 : i1 to i32
    %c0_i32_10 = arith.constant 0 : i32
    %12 = arith.cmpi ne, %11, %c0_i32_10 : i32
    scf.if %12 {
      %c0_11 = arith.constant 0 : index
      %c0_12 = arith.constant 0 : index
      %c0_13 = arith.constant 0 : index
      %13 = vector.load %arg6[%c0_11, %c0_12, %c0_13] : memref<2x4x128xf32, #tpu.memory_space<vmem>>, vector<2x4x128xf32>
      %cst = arith.constant dense<0.000000e+00> : vector<2x4xf32>
      %14 = vector.multi_reduction <add>, %13, %cst [2] : vector<2x4x128xf32> to vector<2x4xf32>
      %cst_14 = arith.constant 3.906250e-03 : f32
      %15 = vector.broadcast %cst_14 : f32 to vector<2x4xf32>
      %16 = arith.mulf %14, %15 : vector<2x4xf32>
      %c0_15 = arith.constant 0 : index
      %c0_16 = arith.constant 0 : index
      %17 = vector.load %arg3[%c0_15, %c0_16] : memref<4x128xf32, #tpu.memory_space<vmem>>, vector<4x128xf32>
      %cst_17 = arith.constant dense<0.000000e+00> : vector<2x128xf32>
      %18 = tpu.matmul %16, %17, %cst_17 {dimension_numbers = #tpu.dot_dimension_numbers<[1], [0], [0], [1], [0, 0, 1, 1], [], []>} : vector<2x4xf32>, vector<4x128xf32>, vector<2x128xf32> -> vector<2x128xf32>
      %c0_18 = arith.constant 0 : index
      %c0_19 = arith.constant 0 : index
      %19 = vector.load %arg4[%c0_18, %c0_19] : memref<1x128xf32, #tpu.memory_space<vmem>>, vector<1x128xf32>
      %20 = vector.broadcast %19 : vector<1x128xf32> to vector<2x128xf32>
      %21 = arith.addf %18, %20 : vector<2x128xf32>
      %cst_20 = arith.constant 0.000000e+00 : f32
      %22 = vector.broadcast %cst_20 : f32 to vector<2x128xf32>
      %23 = arith.cmpf oge, %21, %22 : vector<2x128xf32>
      %cst_21 = arith.constant 0.00999999977 : f32
      %24 = vector.broadcast %cst_21 : f32 to vector<2x128xf32>
      %25 = arith.mulf %24, %21 : vector<2x128xf32>
      %26 = arith.select %23, %21, %25 : vector<2x128xi1>, vector<2x128xf32>
      %c0_22 = arith.constant 0 : index
      %c0_23 = arith.constant 0 : index
      %27 = vector.load %arg5[%c0_22, %c0_23] : memref<2x128xf32, #tpu.memory_space<vmem>>, vector<2x128xf32>
      tpu.vector_store %arg5[%c0_22, %c0_23], %26 {strides = array<i32>} : memref<2x128xf32, #tpu.memory_space<vmem>>, vector<2x128xf32>,
    } else {
    }
    return
  }
  func.func @transform_0(%arg0: i32, %arg1: i32) -> (i32, i32, i32) {
    %c0_i32 = arith.constant 0 : i32
    %c0_i32_0 = arith.constant 0 : i32
    return %arg0, %c0_i32, %arg1 : i32, i32, i32
  }
  func.func @transform_1(%arg0: i32, %arg1: i32) -> (i32, i32) {
    %c0_i32 = arith.constant 0 : i32
    %c0_i32_0 = arith.constant 0 : i32
    %c0_i32_1 = arith.constant 0 : i32
    return %c0_i32, %c0_i32_0 : i32, i32
  }
  func.func @transform_2(%arg0: i32, %arg1: i32) -> (i32, i32) {
    %c0_i32 = arith.constant 0 : i32
    %c0_i32_0 = arith.constant 0 : i32
    %c0_i32_1 = arith.constant 0 : i32
    return %c0_i32, %c0_i32_0 : i32, i32
  }
  func.func @transform_3(%arg0: i32, %arg1: i32) -> (i32, i32) {
    %c0_i32 = arith.constant 0 : i32
    %c0_i32_0 = arith.constant 0 : i32
    return %arg0, %c0_i32 : i32, i32
  }
}

</mosaic_0001>

<llo_original>
// kernel: tpu_custom_call.1
$region0: #{tpu_custom_call.1}
  #allocation0 [shape = 'u32[]', space=smem, size = 0x4, offset = 0x4, fixed_abs, tag = 'smem constant byte address 0x4 - core index']
  #allocation1 [shape = 'u32[144,128]{1,0:T(1,128)}', space=vmem, size = 0x12000, scoped, tag = 'internal scratch']
  #allocation2 [shape = 'f32[2,4,128]{2,1,0:T(4,128)}', space=vmem, size = 0x1000, scoped, tag = 'scratch operand']
  %s0 = inlined_call_operand.hbm [shape: f32[2,4,256], index: 0, kind: input, shape index: {}]
  %s1 = inlined_call_operand.hbm [shape: f32[4,128], index: 1, kind: input, shape index: {}]
  %s2 = inlined_call_operand.vmem [shape: f32[1,128], index: 2, kind: input, shape index: {}]
  %s3 = inlined_call_operand.hbm [shape: f32[2,128], index: 3, kind: output, shape index: {}]
  %s4 = sld [smem:[#allocation0]]
  $region38: #{tpu_custom_call.1} parent=0
    _
  %s6 = ssub.s32 1, %s4
  %s7 = scalar_select 0, %s6, %s4
  $region1: #{tpu_custom_call.1} parent=0
    #allocation3 [shape = 'u8[8192]{0}', space=vmem, size = 0x2000, scoped, tag = 'input window, operand 0, single buffered']
    #allocation4 [shape = 's32[1]{0}', space=sflag, size = 0x4, scoped, tag = 'scoped memory for tpu_custom_call.1']
    #allocation5 [shape = 's32[1]{0}', space=sflag, size = 0x4, scoped, tag = 'scoped memory for tpu_custom_call.1']
    #allocation6 [shape = 'u8[2048]{0}', space=vmem, size = 0x800, scoped, tag = 'input window, operand 1, single buffered']
    #allocation7 [shape = 's32[1]{0}', space=sflag, size = 0x4, scoped, tag = 'scoped memory for tpu_custom_call.1']
    #allocation8 [shape = 'u8[1024]{0}', space=vmem, size = 0x400, scoped, tag = 'output window, operand 0, single buffered']
    %8 = vsyncpa [#allocation4], 0
    %9 = vsyncpa [#allocation7], 0
    %10 = vsyncpa [#allocation5], 0
    // Predicated region
    $region2: #{tpu_custom_call.1} parent=1 // pred_check
      _
    $region3: #{tpu_custom_call.1} parent=1 // pred_check_branch
      %12 = sbr.rel (0) target = $region5
    $region4: #{tpu_custom_call.1} parent=1 // pred_region
      %s14 = ssub.s32 256, 256
      %15 = vsyncadd [#allocation4], %s14
      %s16 = sshll.u32 [#allocation3], 4
      %s17 = int_to_ptr.vmem [resolvable:$true] %s16
      %22 = dma.hbm_to_vmem [thread:$0]  %s0, 256, %s17, [#allocation4], 128, 128, 8
    $region5: #{tpu_custom_call.1} parent=1 // pred_fallthru
      _
    // Predicated region
    $region6: #{tpu_custom_call.1} parent=1 // pred_check
      _
    $region7: #{tpu_custom_call.1} parent=1 // pred_check_branch
      %24 = sbr.rel (0) target = $region9
    $region8: #{tpu_custom_call.1} parent=1 // pred_region
      %s26 = ssub.s32 64, 64
      %27 = vsyncadd [#allocation7], %s26
      %s29 = sshll.u32 [#allocation6], 4
      %s30 = int_to_ptr.vmem [resolvable:$true] %s29
      %32 = dma.hbm_to_vmem [thread:$0]  %s1, 64, %s30, [#allocation7]
    $region9: #{tpu_custom_call.1} parent=1 // pred_fallthru
      _
    // Predicated region
    $region10: #{tpu_custom_call.1} parent=1 // pred_check
      _
    $region11: #{tpu_custom_call.1} parent=1 // pred_check_branch
      %34 = sbr.rel (0) target = $region13
    $region12: #{tpu_custom_call.1} parent=1 // pred_region
      _
    $region13: #{tpu_custom_call.1} parent=1 // pred_fallthru
      _
    // Predicated region
    $region14: #{tpu_custom_call.1} parent=1 // pred_check
      _
    $region15: #{tpu_custom_call.1} parent=1 // pred_check_branch
      %36 = sbr.rel (0) target = $region17
    $region16: #{tpu_custom_call.1} parent=1 // pred_region
      %37 = dma.done [#allocation4], 256
    $region17: #{tpu_custom_call.1} parent=1 // pred_fallthru
      _
    // Predicated region
    $region18: #{tpu_custom_call.1} parent=1 // pred_check
      _
    $region19: #{tpu_custom_call.1} parent=1 // pred_check_branch
      %39 = sbr.rel (0) target = $region21
    $region20: #{tpu_custom_call.1} parent=1 // pred_region
      %40 = dma.done [#allocation7], 64
    $region21: #{tpu_custom_call.1} parent=1 // pred_fallthru
      _
    %p41 = scmp.eq.s32.totalorder 0, 0
    // Predicated region
    $region22: #{tpu_custom_call.1} parent=1 // pred_check
      %p42 = pneg %p41
    $region23: #{tpu_custom_call.1} parent=1 // pred_check_branch
      %44 = sbr.rel (%p42) target = $region25
    $region24: #{tpu_custom_call.1} parent=1 // pred_region
      %45 = vst [vmem:[#allocation2] sm:$0xf] 0.0
      %46 = vst [vmem:[#allocation2 + $0x4] sm:$0xf] 0.0
    $region25: #{tpu_custom_call.1} parent=1 // pred_fallthru
      _
    %v47 = vld [vmem:[#allocation3] sm:$0xff]
    %v48 = vld [vmem:[#allocation3 + $0x8] sm:$0xff]
    %v51 = vrot.slane %v47, 4
    %v52 = vrot.slane %v48, 4
    %v55 = vadd.f32 %v47, %v51
    %v56 = vadd.f32 %v48, %v52
    %v57 = vld [vmem:[#allocation2] sm:$0xf]
    %v58 = vld [vmem:[#allocation2 + $0x4] sm:$0xf]
    %v59 = vadd.f32 %v57, %v55
    %v60 = vadd.f32 %v58, %v56
    %61 = vst [vmem:[#allocation2] sm:$0xf] %v59
    %62 = vst [vmem:[#allocation2 + $0x4] sm:$0xf] %v60
    // Predicated region
    $region26: #{tpu_custom_call.1} parent=1 // pred_check
      %p63 = pneg %p41
    $region27: #{tpu_custom_call.1} parent=1 // pred_check_branch
      %65 = sbr.rel (%p63) target = $region29
    $region28: #{tpu_custom_call.1} parent=1 // pred_region
      %v66 = vld [vmem:[#allocation2] sm:$0xf]
      %v67 = vld [vmem:[#allocation2 + $0x4] sm:$0xf]
      %vm68 = vcmask 1043456
      %v69 = vsel %vm68, %v66, 0.0
      %70 = vadd.xlane.f32.xlu0 %v69
      %v71 = vpop.xlane.xlu0 %70
      %v72 = vsel %vm68, %v67, 0.0
      %73 = vadd.xlane.f32.xlu0 %v72
      %v74 = vpop.xlane.xlu0 %73
      %v75 = vmul.f32 %v71, 0.00390625
      %v76 = vmul.f32 %v74, 0.00390625
      %v77 = vld [vmem:[#allocation6] sm:$0xf]
      %v78 = vld [vmem:[%s2] sm:$0x1]
      %v80 = vlaneseq
      %v81 = vshrl.u32 %v80, 7
      %v82 = vsub.s32 0, %v81
      %v83 = vrot.slane %v78, %v82
      %v87 = vlaneseq
      %v88 = vand.u32 %v87, 127
      %v89 = vlaneseq
      %v90 = vshrl.u32 %v89, 7
      %v91 = vsub.s32 %v88, %v90
      %v92 = vrot.slane %v75, %v91
      %v93 = vlaneseq
      %v94 = vshrl.u32 %v93, 7
      %v95 = vsub.s32 %v88, %v94
      %v96 = vrot.slane %v76, %v95
      %vm97 = vcmask 1041409
      %v98 = vsel %vm97, %v96, %v92
      %vm99 = vcmask 31744
      %v100 = vsel %vm99, %v98, 0
      %v103 = vsel %vm68, %v77, 0
      %105 = vmatprep.subr.mxu0 0.0
      %106 = vmatpush1.msra.mxu0 0.0
      %107 = vmatprep.subr.mxu0 0.0
      %108 = vmatpush1.msra.mxu0 0.0
      %109 = vmatprep.subr.mxu0 0.0
      %110 = vmatpush1.msra.mxu0 0.0
      %111 = vmatprep.subr.mxu0 0.0
      %112 = vmatpush1.msra.mxu0 0.0
      %113 = vmatprep.subr.mxu0 0.0
      %114 = vmatpush1.msra.mxu0 0.0
      %115 = vmatprep.subr.mxu0 0.0
      %116 = vmatpush1.msra.mxu0 0.0
      %117 = vmatprep.subr.mxu0 0.0
      %118 = vmatpush1.msra.mxu0 0.0
      %119 = vmatprep.subr.mxu0 0.0
      %120 = vmatpush1.msra.mxu0 0.0
      %121 = vmatprep.subr.mxu0 0.0
      %122 = vmatpush1.msra.mxu0 0.0
      %123 = vmatprep.subr.mxu0 0.0
      %124 = vmatpush1.msra.mxu0 0.0
      %125 = vmatprep.subr.mxu0 0.0
      %126 = vmatpush1.msra.mxu0 0.0
      %127 = vmatprep.subr.mxu0 0.0
      %128 = vmatpush1.msra.mxu0 0.0
      %129 = vmatprep.subr.mxu0 0.0
      %130 = vmatpush1.msra.mxu0 0.0
      %131 = vmatprep.subr.mxu0 0.0
      %132 = vmatpush1.msra.mxu0 0.0
      %133 = vmatprep.subr.mxu0 0.0
      %134 = vmatpush1.msra.mxu0 0.0
      %135 = vmatprep.subr.mxu0 0.0
      %136 = vmatpush1.msra.mxu0 %v103
      %137 = vmatprep.subr.mxu0 0.0
      %138 = vmatpush2.msra.mxu0 0.0
      %139 = vmatprep.subr.mxu0 0.0
      %140 = vmatpush2.msra.mxu0 0.0
      %141 = vmatprep.subr.mxu0 0.0
      %142 = vmatpush2.msra.mxu0 0.0
      %143 = vmatprep.subr.mxu0 0.0
      %144 = vmatpush2.msra.mxu0 0.0
      %145 = vmatprep.subr.mxu0 0.0
      %146 = vmatpush2.msra.mxu0 0.0
      %147 = vmatprep.subr.mxu0 0.0
      %148 = vmatpush2.msra.mxu0 0.0
      %149 = vmatprep.subr.mxu0 0.0
      %150 = vmatpush2.msra.mxu0 0.0
      %151 = vmatprep.subr.mxu0 0.0
      %152 = vmatpush2.msra.mxu0 0.0
      %153 = vmatprep.subr.mxu0 0.0
      %154 = vmatpush2.msra.mxu0 0.0
      %155 = vmatprep.subr.mxu0 0.0
      %156 = vmatpush2.msra.mxu0 0.0
      %157 = vmatprep.subr.mxu0 0.0
      %158 = vmatpush2.msra.mxu0 0.0
      %159 = vmatprep.subr.mxu0 0.0
      %160 = vmatpush2.msra.mxu0 0.0
      %161 = vmatprep.subr.mxu0 0.0
      %162 = vmatpush2.msra.mxu0 0.0
      %163 = vmatprep.subr.mxu0 0.0
      %164 = vmatpush2.msra.mxu0 0.0
      %165 = vmatprep.subr.mxu0 0.0
      %166 = vmatpush2.msra.mxu0 0.0
      %167 = vmatprep.subr.mxu0 0.0
      %168 = vmatpush2.msra.mxu0 0.0
      %169 = vmatprep.mubr.f32.mxu0 0.0
      %170 = vmatmul.mubr.f32.gmra.mxu0 %v100
      %v171 = vpop.f32.mrf.mxu0
      %v172 = vadd.f32 %v83, %v171
      %v173 = vpop.f32.mrf.mxu0
      %174 = vdwg.mxu0
      %vm175 = vcmp.ge.f32.partialorder %v172, 0.0
      %v176 = vmul.f32 %v172, 0.01
      %v177 = vsel %vm175, %v172, %v176
      %178 = vst [vmem:[#allocation8] sm:$0x3] %v177
    $region29: #{tpu_custom_call.1} parent=1 // pred_fallthru
      _
    // Predicated region
    $region30: #{tpu_custom_call.1} parent=1 // pred_check
      _
    $region31: #{tpu_custom_call.1} parent=1 // pred_check_branch
      %180 = sbr.rel (0) target = $region33
    $region32: #{tpu_custom_call.1} parent=1 // pred_region
      %s182 = ssub.s32 32, 32
      %183 = vsyncadd [#allocation5], %s182
      %s185 = sshll.u32 [#allocation8], 4
      %s186 = int_to_ptr.vmem [resolvable:$true] %s185
      %188 = dma.vmem_to_hbm [thread:$0]  %s186, 32, %s3, [#allocation5]
    $region33: #{tpu_custom_call.1} parent=1 // pred_fallthru
      _
    // Predicated region
    $region34: #{tpu_custom_call.1} parent=1 // pred_check
      _
    $region35: #{tpu_custom_call.1} parent=1 // pred_check_branch
      %190 = sbr.rel (0) target = $region37
    $region36: #{tpu_custom_call.1} parent=1 // pred_region
      %191 = dma.done [#allocation5], 32
    $region37: #{tpu_custom_call.1} parent=1 // pred_fallthru
      _
    %192 = vsyncpa [#allocation4], 1
    %193 = vsyncpa [#allocation7], 1
    %194 = vsyncpa [#allocation5], 1

</llo_original>
